<compile_context>
chip_gen: v7x
topology: tpu7x:2x2x1
jax: 0.10.0
libtpu: 0.0.40
codegen_flags: <defaults>
</compile_context>

<pallas_src>
import functools

import jax
import jax.numpy as jnp
from jax.experimental import pallas as pl
from jax.experimental.pallas import tpu as pltpu

BN_EPS = 1e-5


def _round_up(x, m):
    return (x + m - 1) // m * m


def _fused_kernel(x_ref, w1_ref, g1_ref, b1_ref, w2_ref, g2_ref, b2_ref,
                  o_ref, sum1_ref, sumsq1_ref, sum2_ref, sumsq2_ref,
                  *cache_refs, inv_m, m_valid, lane_tile, cache, has_pad):
    """One grid step of the 3-phase fused ProgressiveDimReduction.

    x_ref:            (C_in, LT)  bf16   lane tile of the (C_in, N*H*W) slab
    w1_ref:           (C1, C_in)  bf16   layer-1 1x1-conv weight
    g1_ref, b1_ref:   (C1, 1)     f32    BN1 gamma / beta
    w2_ref:           (C2, C1)    bf16
    g2_ref, b2_ref:   (C2, 1)     f32
    o_ref:            (C2, LT)    f32    output lane tile (written in phase 2)
    sum*/sumsq*:      (Cx, 1)     f32    persistent per-channel stat accumulators
    cache_refs:       optional (T, C1, LT) f32 y1 cache, (T, C2, LT) f32 y2 cache
    """
    p = pl.program_id(0)      # phase: 0 = layer-1 stats, 1 = layer-2 stats, 2 = write
    j = pl.program_id(1)      # lane tile

    if cache:
        y1c_ref, y2c_ref = cache_refs

    def bn_scale_shift(sum_ref, sumsq_ref, g_ref, b_ref):
        # Training-mode (biased) batch statistics, folded into one FMA:
        #   y_hat = y * scale + shift
        mean = sum_ref[...] * inv_m
        var = jnp.maximum(sumsq_ref[...] * inv_m - mean * mean, 0.0)  # clamp f32 cancellation
        scale = g_ref[...] * jax.lax.rsqrt(var + BN_EPS)
        shift = b_ref[...] - mean * scale
        return scale, shift

    def conv1():
        # bf16 MXU matmul, f32 accumulation.
        return jnp.dot(w1_ref[...], x_ref[...], preferred_element_type=jnp.float32)

    def hidden():
        y1 = y1c_ref[j] if cache else conv1()
        scale1, shift1 = bn_scale_shift(sum1_ref, sumsq1_ref, g1_ref, b1_ref)
        return jnp.maximum(y1 * scale1 + shift1, 0.0)

    def conv2():
        return jnp.dot(w2_ref[...], hidden().astype(jnp.bfloat16),
                       preferred_element_type=jnp.float32)

    # ---------------- phase 0: layer-1 conv + statistics -------------------
    @pl.when((p == 0) & (j == 0))
    def _init_stats1():
        sum1_ref[...] = jnp.zeros_like(sum1_ref)
        sumsq1_ref[...] = jnp.zeros_like(sumsq1_ref)

    @pl.when(p == 0)
    def _accum_stats1():
        y1 = conv1()
        if cache:
            y1c_ref[j] = y1                       # persist for phases 1-2
        # Padded x columns are exactly zero -> zero contribution to the sums.
        sum1_ref[...] += jnp.sum(y1, axis=1, keepdims=True)
        sumsq1_ref[...] += jnp.sum(y1 * y1, axis=1, keepdims=True)

    # ---------------- phase 1: BN1+ReLU, layer-2 conv + statistics ---------
    @pl.when((p == 1) & (j == 0))
    def _init_stats2():
        sum2_ref[...] = jnp.zeros_like(sum2_ref)
        sumsq2_ref[...] = jnp.zeros_like(sumsq2_ref)

    @pl.when(p == 1)
    def _accum_stats2():
        y2 = conv2()
        if cache:
            y2c_ref[j] = y2                       # persist for phase 2
        if has_pad:
            # Mask padded lane columns out of the layer-2 statistics.
            cols = j * lane_tile + jax.lax.broadcasted_iota(
                jnp.int32, (1, lane_tile), 1)
            y2 = jnp.where(cols < m_valid, y2, 0.0)
        sum2_ref[...] += jnp.sum(y2, axis=1, keepdims=True)
        sumsq2_ref[...] += jnp.sum(y2 * y2, axis=1, keepdims=True)

    # ---------------- phase 2: BN2+ReLU, write output ----------------------
    @pl.when(p == 2)
    def _write_out():
        y2 = y2c_ref[j] if cache else conv2()
        scale2, shift2 = bn_scale_shift(sum2_ref, sumsq2_ref, g2_ref, b2_ref)
        o_ref[...] = jnp.maximum(y2 * scale2 + shift2, 0.0).astype(o_ref.dtype)


def progressive_dim_reduction(x_nchw, params, *, lane_tile=None,
                              max_cache_bytes=28 * 1024 * 1024):
    """Forward pass. x_nchw: (N, C_in, H, W) f32 -> (N, C_last, H, W) f32."""
    (w1, g1, b1), (w2, g2, b2) = params
    N, C, H, W = x_nchw.shape
    HW = H * W
    M = N * HW
    C1 = w1.shape[0]
    C2 = w2.shape[0]

    # (N, C, H, W) -> (C, N*HW): one XLA transpose pass; the bf16 cast fuses
    # into it (f32 read, bf16 write) so the kernel reads x from HBM only once.
    x_cm = jnp.transpose(x_nchw.reshape(N, C, HW), (1, 0, 2)).reshape(C, M)
    x_cm = x_cm.astype(jnp.bfloat16)

    # Lane-dense tiling: lane tile is a multiple of 128, 512-2048 sweet spot.
    if lane_tile is None:
        lane_tile = min(_round_up(M, 128), 2048)
    lane_tile = _round_up(lane_tile, 128)
    m_pad = _round_up(M, lane_tile)
    if m_pad != M:
        x_cm = jnp.pad(x_cm, ((0, 0), (0, m_pad - M)))   # zero pad
    num_tiles = m_pad // lane_tile
    has_pad = m_pad != M

    # VMEM-capacity gate for the intermediate caches (v7x: 64 MiB / TC).
    cache_bytes = C1 * m_pad * 4 + C2 * m_pad * 4
    cache = cache_bytes <= max_cache_bytes

    kernel = functools.partial(
        _fused_kernel, inv_m=1.0 / float(M), m_valid=M,
        lane_tile=lane_tile, cache=cache, has_pad=has_pad)

    scratch = [
        pltpu.VMEM((C1, 1), jnp.float32),   # sum   of layer-1 pre-BN activations
        pltpu.VMEM((C1, 1), jnp.float32),   # sumsq of layer-1 pre-BN activations
        pltpu.VMEM((C2, 1), jnp.float32),   # sum   of layer-2 pre-BN activations
        pltpu.VMEM((C2, 1), jnp.float32),   # sumsq of layer-2 pre-BN activations
    ]
    if cache:
        scratch += [
            pltpu.VMEM((num_tiles, C1, lane_tile), jnp.float32),  # y1 cache
            pltpu.VMEM((num_tiles, C2, lane_tile), jnp.float32),  # y2 cache
        ]

    if cache:
        def x_index(p, j):
            # x is only needed in phase 0; pin the block index afterwards so
            # Pallas never re-fetches x from HBM in phases 1-2.
            return 0, jnp.where(p == 0, j, num_tiles - 1)
    else:
        def x_index(p, j):
            return 0, j            # recompute fallback: refetch per phase

    def o_index(p, j):
        # Output tiles are only written in phase 2.  Pinning the index to 0 in
        # phases 0-1 keeps the (never-written) resident block from being
        # flushed; o_ref must NOT be written outside phase 2.
        return 0, jnp.where(p == 2, j, 0)

    const = lambda p, j: (0, 0)

    out = pl.pallas_call(
        kernel,
        out_shape=jax.ShapeDtypeStruct((C2, m_pad), jnp.float32),
        grid_spec=pltpu.PrefetchScalarGridSpec(
            num_scalar_prefetch=0,
            grid=(3, num_tiles),                    # (phase, lane tile)
            in_specs=[
                pl.BlockSpec((C, lane_tile), x_index),
                pl.BlockSpec((C1, C), const),
                pl.BlockSpec((C1, 1), const),
                pl.BlockSpec((C1, 1), const),
                pl.BlockSpec((C2, C1), const),
                pl.BlockSpec((C2, 1), const),
                pl.BlockSpec((C2, 1), const),
            ],
            out_specs=pl.BlockSpec((C2, lane_tile), o_index),
            scratch_shapes=scratch,
        ),
        compiler_params=pltpu.CompilerParams(
            # Both axes carry sequential state (phase order + cross-tile stat
            # accumulation in scratch), so neither may be sharded/reordered.
            # TODO(synk): v7x two-TensorCore lane split with per-core partials.
            dimension_semantics=("arbitrary", "arbitrary"),
            vmem_limit_bytes=48 * 1024 * 1024,      # safe on v5e/v6e/v7x
        ),
    )(x_cm, w1.astype(jnp.bfloat16), g1, b1, w2.astype(jnp.bfloat16), g2, b2)

    out = out[:, :M].reshape(C2, N, HW)
    return jnp.transpose(out, (1, 0, 2)).reshape(N, C2, H, W)


def make_params(key, c_in, c_first, c_last):
    """Matches PyTorch _init_weight():
       Conv2d: kaiming_normal_(mode='fan_out') -> std = sqrt(2 / C_out) for 1x1.
       BatchNorm2d: weight (gamma) = 1, bias (beta) = 0.
       Conv weights stored as (C_out, C_in) == PyTorch (C_out, C_in, 1, 1).
    """
    k1, k2 = jax.random.split(key)
    w1 = jax.random.normal(k1, (c_first, c_in), jnp.float32) * jnp.sqrt(2.0 / c_first)
    w2 = jax.random.normal(k2, (c_last, c_first), jnp.float32) * jnp.sqrt(2.0 / c_last)
    gamma1 = jnp.ones((c_first, 1), jnp.float32)
    beta1 = jnp.zeros((c_first, 1), jnp.float32)
    gamma2 = jnp.ones((c_last, 1), jnp.float32)
    beta2 = jnp.zeros((c_last, 1), jnp.float32)
    return (w1, gamma1, beta1), (w2, gamma2, beta2)


def _reference(x_nchw, params):
    """Pure-JAX reference (Conv1x1 -> batch-stat BN -> ReLU, twice) with the
    same bf16 matmul quantization as the kernel."""
    (w1, g1, b1), (w2, g2, b2) = params
    N, C, H, W = x_nchw.shape
    x = x_nchw.reshape(N, C, H * W)

    def block(xin, w, g, bta):
        y = jnp.einsum("oc,nch->noh", w.astype(jnp.bfloat16),
                       xin.astype(jnp.bfloat16),
                       preferred_element_type=jnp.float32)
        mean = jnp.mean(y, axis=(0, 2), keepdims=True)
        var = jnp.mean(y * y, axis=(0, 2), keepdims=True) - mean * mean
        yh = (y - mean) * jax.lax.rsqrt(var + BN_EPS)
        return jnp.maximum(yh * g[None] + bta[None], 0.0)

    h = block(x, w1, g1, b1)
    y = block(h, w2, g2, b2)
    return y.reshape(N, -1, H, W)


if __name__ == "__main__":
    key = jax.random.PRNGKey(0)
    kx, kp, kx2 = jax.random.split(key, 3)

    # Main case: progressive reduction 32 -> 16 -> 8 on (2, 32, 16, 16).
    # N*H*W = 512 -> one 512-wide lane tile, no padding, cached-intermediate path.
    N, C_IN, H, W = 2, 32, 16, 16
    C_FIRST, C_LAST = 16, 8
    x = jax.random.normal(kx, (N, C_IN, H, W), jnp.float32)
    params = make_params(kp, C_IN, C_FIRST, C_LAST)

    out = jax.block_until_ready(progressive_dim_reduction(x, params))
    assert out.shape == (N, C_LAST, H, W)
    assert bool(jnp.all(out >= 0.0))                       # ReLU output
    ref = jax.block_until_ready(_reference(x, params))
    assert bool(jnp.allclose(out, ref, atol=1e-2, rtol=1e-2)), \
        float(jnp.max(jnp.abs(out - ref)))

    # Second case: non-multiple-of-128 spatial size (lane padding + 2 lane
    # tiles) and the VMEM-gated recompute fallback (max_cache_bytes=0).
    x2 = jax.random.normal(kx2, (2, C_IN, 10, 12), jnp.float32)
    out2 = jax.block_until_ready(
        progressive_dim_reduction(x2, params, lane_tile=128, max_cache_bytes=0))
    ref2 = jax.block_until_ready(_reference(x2, params))
    assert out2.shape == ref2.shape
    assert bool(jnp.all(out2 >= 0.0))
    assert bool(jnp.allclose(out2, ref2, atol=1e-2, rtol=1e-2)), \
        float(jnp.max(jnp.abs(out2 - ref2)))

    print("KERNEL_OK")
</pallas_src>

<mosaic_0001>
module attributes {stable_mosaic.version = 11 : i64} {
  func.func @_fused_kernel(%arg0: i32, %arg1: i32, %arg2: memref<32x512xbf16, #tpu.memory_space<vmem>>, %arg3: memref<16x32xbf16, #tpu.memory_space<vmem>>, %arg4: memref<16x1xf32, #tpu.memory_space<vmem>>, %arg5: memref<16x1xf32, #tpu.memory_space<vmem>>, %arg6: memref<8x16xbf16, #tpu.memory_space<vmem>>, %arg7: memref<8x1xf32, #tpu.memory_space<vmem>>, %arg8: memref<8x1xf32, #tpu.memory_space<vmem>>, %arg9: memref<8x512xf32, #tpu.memory_space<vmem>>, %arg10: memref<16x1xf32, #tpu.memory_space<vmem>>, %arg11: memref<16x1xf32, #tpu.memory_space<vmem>>, %arg12: memref<8x1xf32, #tpu.memory_space<vmem>>, %arg13: memref<8x1xf32, #tpu.memory_space<vmem>>, %arg14: memref<1x16x512xf32, #tpu.memory_space<vmem>>, %arg15: memref<1x8x512xf32, #tpu.memory_space<vmem>>) attributes {dimension_semantics = [#tpu.dimension_semantics<arbitrary>, #tpu.dimension_semantics<arbitrary>], iteration_bounds = array<i64: 3, 1>, scalar_prefetch = 0 : i64, scratch_operands = 6 : i64, tpu.core_type = #tpu.core_type<tc>, window_params = [{transform_indices = @transform_0, window_bounds = array<i64: 32, 512>}, {pipeline_mode = #tpu.pipeline_mode<synchronous>, transform_indices = @transform_1, window_bounds = array<i64: 16, 32>}, {pipeline_mode = #tpu.pipeline_mode<synchronous>, transform_indices = @transform_2, window_bounds = array<i64: 16, 1>}, {pipeline_mode = #tpu.pipeline_mode<synchronous>, transform_indices = @transform_3, window_bounds = array<i64: 16, 1>}, {pipeline_mode = #tpu.pipeline_mode<synchronous>, transform_indices = @transform_4, window_bounds = array<i64: 8, 16>}, {pipeline_mode = #tpu.pipeline_mode<synchronous>, transform_indices = @transform_5, window_bounds = array<i64: 8, 1>}, {pipeline_mode = #tpu.pipeline_mode<synchronous>, transform_indices = @transform_6, window_bounds = array<i64: 8, 1>}, {transform_indices = @transform_7, window_bounds = array<i64: 8, 512>}]} {
    %c0_i32 = arith.constant 0 : i32
    %0 = arith.cmpi eq, %arg0, %c0_i32 : i32
    %c0_i32_0 = arith.constant 0 : i32
    %1 = arith.cmpi eq, %arg1, %c0_i32_0 : i32
    %2 = arith.andi %0, %1 : i1
    %3 = arith.extui %2 : i1 to i32
    %c0_i32_1 = arith.constant 0 : i32
    %4 = arith.cmpi ne, %3, %c0_i32_1 : i32
    scf.if %4 {
      %cst = arith.constant 0.000000e+00 : f32
      %19 = vector.broadcast %cst : f32 to vector<16x1xf32>
      %c0 = arith.constant 0 : index
      %c0_9 = arith.constant 0 : index
      %20 = vector.load %arg10[%c0, %c0_9] : memref<16x1xf32, #tpu.memory_space<vmem>>, vector<16x1xf32>
      tpu.vector_store %arg10[%c0, %c0_9], %19 {strides = array<i32>} : memref<16x1xf32, #tpu.memory_space<vmem>>, vector<16x1xf32>,
      %cst_10 = arith.constant 0.000000e+00 : f32
      %21 = vector.broadcast %cst_10 : f32 to vector<16x1xf32>
      %c0_11 = arith.constant 0 : index
      %c0_12 = arith.constant 0 : index
      %22 = vector.load %arg11[%c0_11, %c0_12] : memref<16x1xf32, #tpu.memory_space<vmem>>, vector<16x1xf32>
      tpu.vector_store %arg11[%c0_11, %c0_12], %21 {strides = array<i32>} : memref<16x1xf32, #tpu.memory_space<vmem>>, vector<16x1xf32>,
    } else {
    }
    %c0_i32_2 = arith.constant 0 : i32
    %5 = arith.cmpi eq, %arg0, %c0_i32_2 : i32
    %6 = arith.extui %5 : i1 to i32
    %c0_i32_3 = arith.constant 0 : i32
    %7 = arith.cmpi ne, %6, %c0_i32_3 : i32
    scf.if %7 {
      %c0 = arith.constant 0 : index
      %c0_9 = arith.constant 0 : index
      %19 = vector.load %arg3[%c0, %c0_9] : memref<16x32xbf16, #tpu.memory_space<vmem>>, vector<16x32xbf16>
      %c0_10 = arith.constant 0 : index
      %c0_11 = arith.constant 0 : index
      %20 = vector.load %arg2[%c0_10, %c0_11] : memref<32x512xbf16, #tpu.memory_space<vmem>>, vector<32x512xbf16>
      %cst = arith.constant dense<0.000000e+00> : vector<16x512xf32>
      %21 = tpu.matmul %19, %20, %cst {dimension_numbers = #tpu.dot_dimension_numbers<[1], [0], [0], [1], [0, 0, 1, 1], [], []>} : vector<16x32xbf16>, vector<32x512xbf16>, vector<16x512xf32> -> vector<16x512xf32>
      %22 = arith.index_cast %arg1 : i32 to index
      %c0_12 = arith.constant 0 : index
      %c0_13 = arith.constant 0 : index
      %23 = vector.load %arg14[%22, %c0_12, %c0_13] : memref<1x16x512xf32, #tpu.memory_space<vmem>>, vector<1x16x512xf32>
      %24 = vector.shape_cast %23 : vector<1x16x512xf32> to vector<16x512xf32>
      %25 = vector.shape_cast %21 : vector<16x512xf32> to vector<1x16x512xf32>
      tpu.vector_store %arg14[%22, %c0_12, %c0_13], %25 {strides = array<i32>} : memref<1x16x512xf32, #tpu.memory_space<vmem>>, vector<1x16x512xf32>,
      %c0_14 = arith.constant 0 : index
      %c0_15 = arith.constant 0 : index
      %26 = vector.load %arg10[%c0_14, %c0_15] : memref<16x1xf32, #tpu.memory_space<vmem>>, vector<16x1xf32>
      %cst_16 = arith.constant dense<0.000000e+00> : vector<16xf32>
      %27 = vector.multi_reduction <add>, %21, %cst_16 [1] : vector<16x512xf32> to vector<16xf32>
      %28 = vector.shape_cast %27 : vector<16xf32> to vector<16x1xf32>
      %29 = arith.addf %26, %28 : vector<16x1xf32>
      %c0_17 = arith.constant 0 : index
      %c0_18 = arith.constant 0 : index
      %30 = vector.load %arg10[%c0_17, %c0_18] : memref<16x1xf32, #tpu.memory_space<vmem>>, vector<16x1xf32>
      tpu.vector_store %arg10[%c0_17, %c0_18], %29 {strides = array<i32>} : memref<16x1xf32, #tpu.memory_space<vmem>>, vector<16x1xf32>,
      %c0_19 = arith.constant 0 : index
      %c0_20 = arith.constant 0 : index
      %31 = vector.load %arg11[%c0_19, %c0_20] : memref<16x1xf32, #tpu.memory_space<vmem>>, vector<16x1xf32>
      %32 = arith.mulf %21, %21 : vector<16x512xf32>
      %cst_21 = arith.constant dense<0.000000e+00> : vector<16xf32>
      %33 = vector.multi_reduction <add>, %32, %cst_21 [1] : vector<16x512xf32> to vector<16xf32>
      %34 = vector.shape_cast %33 : vector<16xf32> to vector<16x1xf32>
      %35 = arith.addf %31, %34 : vector<16x1xf32>
      %c0_22 = arith.constant 0 : index
      %c0_23 = arith.constant 0 : index
      %36 = vector.load %arg11[%c0_22, %c0_23] : memref<16x1xf32, #tpu.memory_space<vmem>>, vector<16x1xf32>
      tpu.vector_store %arg11[%c0_22, %c0_23], %35 {strides = array<i32>} : memref<16x1xf32, #tpu.memory_space<vmem>>, vector<16x1xf32>,
    } else {
    }
    %c1_i32 = arith.constant 1 : i32
    %8 = arith.cmpi eq, %arg0, %c1_i32 : i32
    %c0_i32_4 = arith.constant 0 : i32
    %9 = arith.cmpi eq, %arg1, %c0_i32_4 : i32
    %10 = arith.andi %8, %9 : i1
    %11 = arith.extui %10 : i1 to i32
    %c0_i32_5 = arith.constant 0 : i32
    %12 = arith.cmpi ne, %11, %c0_i32_5 : i32
    scf.if %12 {
      %cst = arith.constant 0.000000e+00 : f32
      %19 = vector.broadcast %cst : f32 to vector<8x1xf32>
      %c0 = arith.constant 0 : index
      %c0_9 = arith.constant 0 : index
      %20 = vector.load %arg12[%c0, %c0_9] : memref<8x1xf32, #tpu.memory_space<vmem>>, vector<8x1xf32>
      tpu.vector_store %arg12[%c0, %c0_9], %19 {strides = array<i32>} : memref<8x1xf32, #tpu.memory_space<vmem>>, vector<8x1xf32>,
      %cst_10 = arith.constant 0.000000e+00 : f32
      %21 = vector.broadcast %cst_10 : f32 to vector<8x1xf32>
      %c0_11 = arith.constant 0 : index
      %c0_12 = arith.constant 0 : index
      %22 = vector.load %arg13[%c0_11, %c0_12] : memref<8x1xf32, #tpu.memory_space<vmem>>, vector<8x1xf32>
      tpu.vector_store %arg13[%c0_11, %c0_12], %21 {strides = array<i32>} : memref<8x1xf32, #tpu.memory_space<vmem>>, vector<8x1xf32>,
    } else {
    }
    %c1_i32_6 = arith.constant 1 : i32
    %13 = arith.cmpi eq, %arg0, %c1_i32_6 : i32
    %14 = arith.extui %13 : i1 to i32
    %c0_i32_7 = arith.constant 0 : i32
    %15 = arith.cmpi ne, %14, %c0_i32_7 : i32
    scf.if %15 {
      %c0 = arith.constant 0 : index
      %c0_9 = arith.constant 0 : index
      %19 = vector.load %arg6[%c0, %c0_9] : memref<8x16xbf16, #tpu.memory_space<vmem>>, vector<8x16xbf16>
      %20 = arith.index_cast %arg1 : i32 to index
      %c0_10 = arith.constant 0 : index
      %c0_11 = arith.constant 0 : index
      %21 = vector.load %arg14[%20, %c0_10, %c0_11] : memref<1x16x512xf32, #tpu.memory_space<vmem>>, vector<1x16x512xf32>
      %22 = vector.shape_cast %21 : vector<1x16x512xf32> to vector<16x512xf32>
      %c0_12 = arith.constant 0 : index
      %c0_13 = arith.constant 0 : index
      %23 = vector.load %arg10[%c0_12, %c0_13] : memref<16x1xf32, #tpu.memory_space<vmem>>, vector<16x1xf32>
      %cst = arith.constant 0.001953125 : f32
      %24 = vector.broadcast %cst : f32 to vector<16x1xf32>
      %25 = arith.mulf %23, %24 : vector<16x1xf32>
      %c0_14 = arith.constant 0 : index
      %c0_15 = arith.constant 0 : index
      %26 = vector.load %arg11[%c0_14, %c0_15] : memref<16x1xf32, #tpu.memory_space<vmem>>, vector<16x1xf32>
      %cst_16 = arith.constant 0.001953125 : f32
      %27 = vector.broadcast %cst_16 : f32 to vector<16x1xf32>
      %28 = arith.mulf %26, %27 : vector<16x1xf32>
      %29 = arith.mulf %25, %25 : vector<16x1xf32>
      %30 = arith.subf %28, %29 : vector<16x1xf32>
      %cst_17 = arith.constant 0.000000e+00 : f32
      %31 = vector.broadcast %cst_17 : f32 to vector<16x1xf32>
      %32 = arith.maximumf %30, %31 : vector<16x1xf32>
      %c0_18 = arith.constant 0 : index
      %c0_19 = arith.constant 0 : index
      %33 = vector.load %arg4[%c0_18, %c0_19] : memref<16x1xf32, #tpu.memory_space<vmem>>, vector<16x1xf32>
      %cst_20 = arith.constant 9.99999974E-6 : f32
      %34 = vector.broadcast %cst_20 : f32 to vector<16x1xf32>
      %35 = arith.addf %32, %34 : vector<16x1xf32>
      %36 = math.rsqrt %35 : vector<16x1xf32>
      %37 = arith.mulf %33, %36 : vector<16x1xf32>
      %c0_21 = arith.constant 0 : index
      %c0_22 = arith.constant 0 : index
      %38 = vector.load %arg5[%c0_21, %c0_22] : memref<16x1xf32, #tpu.memory_space<vmem>>, vector<16x1xf32>
      %39 = arith.mulf %25, %37 : vector<16x1xf32>
      %40 = arith.subf %38, %39 : vector<16x1xf32>
      %41 = vector.broadcast %37 : vector<16x1xf32> to vector<16x512xf32>
      %42 = arith.mulf %22, %41 : vector<16x512xf32>
      %43 = vector.broadcast %40 : vector<16x1xf32> to vector<16x512xf32>
      %44 = arith.addf %42, %43 : vector<16x512xf32>
      %cst_23 = arith.constant 0.000000e+00 : f32
      %45 = vector.broadcast %cst_23 : f32 to vector<16x512xf32>
      %46 = arith.maximumf %44, %45 : vector<16x512xf32>
      %47 = arith.truncf %46 : vector<16x512xf32> to vector<16x512xbf16>
      %cst_24 = arith.constant dense<0.000000e+00> : vector<8x512xf32>
      %48 = tpu.matmul %19, %47, %cst_24 {dimension_numbers = #tpu.dot_dimension_numbers<[1], [0], [0], [1], [0, 0, 1, 1], [], []>} : vector<8x16xbf16>, vector<16x512xbf16>, vector<8x512xf32> -> vector<8x512xf32>
      %49 = arith.index_cast %arg1 : i32 to index
      %c0_25 = arith.constant 0 : index
      %c0_26 = arith.constant 0 : index
      %50 = vector.load %arg15[%49, %c0_25, %c0_26] : memref<1x8x512xf32, #tpu.memory_space<vmem>>, vector<1x8x512xf32>
      %51 = vector.shape_cast %50 : vector<1x8x512xf32> to vector<8x512xf32>
      %52 = vector.shape_cast %48 : vector<8x512xf32> to vector<1x8x512xf32>
      tpu.vector_store %arg15[%49, %c0_25, %c0_26], %52 {strides = array<i32>} : memref<1x8x512xf32, #tpu.memory_space<vmem>>, vector<1x8x512xf32>,
      %c0_27 = arith.constant 0 : index
      %c0_28 = arith.constant 0 : index
      %53 = vector.load %arg12[%c0_27, %c0_28] : memref<8x1xf32, #tpu.memory_space<vmem>>, vector<8x1xf32>
      %cst_29 = arith.constant dense<0.000000e+00> : vector<8xf32>
      %54 = vector.multi_reduction <add>, %48, %cst_29 [1] : vector<8x512xf32> to vector<8xf32>
      %55 = vector.shape_cast %54 : vector<8xf32> to vector<8x1xf32>
      %56 = arith.addf %53, %55 : vector<8x1xf32>
      %c0_30 = arith.constant 0 : index
      %c0_31 = arith.constant 0 : index
      %57 = vector.load %arg12[%c0_30, %c0_31] : memref<8x1xf32, #tpu.memory_space<vmem>>, vector<8x1xf32>
      tpu.vector_store %arg12[%c0_30, %c0_31], %56 {strides = array<i32>} : memref<8x1xf32, #tpu.memory_space<vmem>>, vector<8x1xf32>,
      %c0_32 = arith.constant 0 : index
      %c0_33 = arith.constant 0 : index
      %58 = vector.load %arg13[%c0_32, %c0_33] : memref<8x1xf32, #tpu.memory_space<vmem>>, vector<8x1xf32>
      %59 = arith.mulf %48, %48 : vector<8x512xf32>
      %cst_34 = arith.constant dense<0.000000e+00> : vector<8xf32>
      %60 = vector.multi_reduction <add>, %59, %cst_34 [1] : vector<8x512xf32> to vector<8xf32>
      %61 = vector.shape_cast %60 : vector<8xf32> to vector<8x1xf32>
      %62 = arith.addf %58, %61 : vector<8x1xf32>
      %c0_35 = arith.constant 0 : index
      %c0_36 = arith.constant 0 : index
      %63 = vector.load %arg13[%c0_35, %c0_36] : memref<8x1xf32, #tpu.memory_space<vmem>>, vector<8x1xf32>
      tpu.vector_store %arg13[%c0_35, %c0_36], %62 {strides = array<i32>} : memref<8x1xf32, #tpu.memory_space<vmem>>, vector<8x1xf32>,
    } else {
    }
    %c2_i32 = arith.constant 2 : i32
    %16 = arith.cmpi eq, %arg0, %c2_i32 : i32
    %17 = arith.extui %16 : i1 to i32
    %c0_i32_8 = arith.constant 0 : i32
    %18 = arith.cmpi ne, %17, %c0_i32_8 : i32
    scf.if %18 {
      %19 = arith.index_cast %arg1 : i32 to index
      %c0 = arith.constant 0 : index
      %c0_9 = arith.constant 0 : index
      %20 = vector.load %arg15[%19, %c0, %c0_9] : memref<1x8x512xf32, #tpu.memory_space<vmem>>, vector<1x8x512xf32>
      %21 = vector.shape_cast %20 : vector<1x8x512xf32> to vector<8x512xf32>
      %c0_10 = arith.constant 0 : index
      %c0_11 = arith.constant 0 : index
      %22 = vector.load %arg12[%c0_10, %c0_11] : memref<8x1xf32, #tpu.memory_space<vmem>>, vector<8x1xf32>
      %cst = arith.constant 0.001953125 : f32
      %23 = vector.broadcast %cst : f32 to vector<8x1xf32>
      %24 = arith.mulf %22, %23 : vector<8x1xf32>
      %c0_12 = arith.constant 0 : index
      %c0_13 = arith.constant 0 : index
      %25 = vector.load %arg13[%c0_12, %c0_13] : memref<8x1xf32, #tpu.memory_space<vmem>>, vector<8x1xf32>
      %cst_14 = arith.constant 0.001953125 : f32
      %26 = vector.broadcast %cst_14 : f32 to vector<8x1xf32>
      %27 = arith.mulf %25, %26 : vector<8x1xf32>
      %28 = arith.mulf %24, %24 : vector<8x1xf32>
      %29 = arith.subf %27, %28 : vector<8x1xf32>
      %cst_15 = arith.constant 0.000000e+00 : f32
      %30 = vector.broadcast %cst_15 : f32 to vector<8x1xf32>
      %31 = arith.maximumf %29, %30 : vector<8x1xf32>
      %c0_16 = arith.constant 0 : index
      %c0_17 = arith.constant 0 : index
      %32 = vector.load %arg7[%c0_16, %c0_17] : memref<8x1xf32, #tpu.memory_space<vmem>>, vector<8x1xf32>
      %cst_18 = arith.constant 9.99999974E-6 : f32
      %33 = vector.broadcast %cst_18 : f32 to vector<8x1xf32>
      %34 = arith.addf %31, %33 : vector<8x1xf32>
      %35 = math.rsqrt %34 : vector<8x1xf32>
      %36 = arith.mulf %32, %35 : vector<8x1xf32>
      %c0_19 = arith.constant 0 : index
      %c0_20 = arith.constant 0 : index
      %37 = vector.load %arg8[%c0_19, %c0_20] : memref<8x1xf32, #tpu.memory_space<vmem>>, vector<8x1xf32>
      %38 = arith.mulf %24, %36 : vector<8x1xf32>
      %39 = arith.subf %37, %38 : vector<8x1xf32>
      %40 = vector.broadcast %36 : vector<8x1xf32> to vector<8x512xf32>
      %41 = arith.mulf %21, %40 : vector<8x512xf32>
      %42 = vector.broadcast %39 : vector<8x1xf32> to vector<8x512xf32>
      %43 = arith.addf %41, %42 : vector<8x512xf32>
      %cst_21 = arith.constant 0.000000e+00 : f32
      %44 = vector.broadcast %cst_21 : f32 to vector<8x512xf32>
      %45 = arith.maximumf %43, %44 : vector<8x512xf32>
      %c0_22 = arith.constant 0 : index
      %c0_23 = arith.constant 0 : index
      %46 = vector.load %arg9[%c0_22, %c0_23] : memref<8x512xf32, #tpu.memory_space<vmem>>, vector<8x512xf32>
      tpu.vector_store %arg9[%c0_22, %c0_23], %45 {strides = array<i32>} : memref<8x512xf32, #tpu.memory_space<vmem>>, vector<8x512xf32>,
    } else {
    }
    return
  }
  func.func @transform_0(%arg0: i32, %arg1: i32) -> (i32, i32) {
    %c0_i32 = arith.constant 0 : i32
    %0 = arith.cmpi eq, %arg0, %c0_i32 : i32
    %c0_i32_0 = arith.constant 0 : i32
    %1 = arith.select %0, %arg1, %c0_i32_0 : i32
    %c0_i32_1 = arith.constant 0 : i32
    %c0_i32_2 = arith.constant 0 : i32
    return %c0_i32_1, %1 : i32, i32
  }
  func.func @transform_1(%arg0: i32, %arg1: i32) -> (i32, i32) {
    %c0_i32 = arith.constant 0 : i32
    %c0_i32_0 = arith.constant 0 : i32
    %c0_i32_1 = arith.constant 0 : i32
    return %c0_i32, %c0_i32_0 : i32, i32
  }
  func.func @transform_2(%arg0: i32, %arg1: i32) -> (i32, i32) {
    %c0_i32 = arith.constant 0 : i32
    %c0_i32_0 = arith.constant 0 : i32
    %c0_i32_1 = arith.constant 0 : i32
    return %c0_i32, %c0_i32_0 : i32, i32
  }
  func.func @transform_3(%arg0: i32, %arg1: i32) -> (i32, i32) {
    %c0_i32 = arith.constant 0 : i32
    %c0_i32_0 = arith.constant 0 : i32
    %c0_i32_1 = arith.constant 0 : i32
    return %c0_i32, %c0_i32_0 : i32, i32
  }
  func.func @transform_4(%arg0: i32, %arg1: i32) -> (i32, i32) {
    %c0_i32 = arith.constant 0 : i32
    %c0_i32_0 = arith.constant 0 : i32
    %c0_i32_1 = arith.constant 0 : i32
    return %c0_i32, %c0_i32_0 : i32, i32
  }
  func.func @transform_5(%arg0: i32, %arg1: i32) -> (i32, i32) {
    %c0_i32 = arith.constant 0 : i32
    %c0_i32_0 = arith.constant 0 : i32
    %c0_i32_1 = arith.constant 0 : i32
    return %c0_i32, %c0_i32_0 : i32, i32
  }
  func.func @transform_6(%arg0: i32, %arg1: i32) -> (i32, i32) {
    %c0_i32 = arith.constant 0 : i32
    %c0_i32_0 = arith.constant 0 : i32
    %c0_i32_1 = arith.constant 0 : i32
    return %c0_i32, %c0_i32_0 : i32, i32
  }
  func.func @transform_7(%arg0: i32, %arg1: i32) -> (i32, i32) {
    %c2_i32 = arith.constant 2 : i32
    %0 = arith.cmpi eq, %arg0, %c2_i32 : i32
    %c0_i32 = arith.constant 0 : i32
    %1 = arith.select %0, %arg1, %c0_i32 : i32
    %c0_i32_0 = arith.constant 0 : i32
    %c0_i32_1 = arith.constant 0 : i32
    return %c0_i32_0, %1 : i32, i32
  }
}

</mosaic_0001>

<llo_original>
// kernel: tpu_custom_call.1
$region0: #{tpu_custom_call.1}
  #allocation0 [shape = 'u32[]', space=smem, size = 0x4, offset = 0x4, fixed_abs, tag = 'smem constant byte address 0x4 - core index']
  #allocation1 [shape = 'u32[144,128]{1,0:T(1,128)}', space=vmem, size = 0x12000, scoped, tag = 'internal scratch']
  #allocation2 [shape = 'f32[16,1]{1,0:T(8,128)}', space=vmem, size = 0x2000, scoped, tag = 'scratch operand']
  #allocation3 [shape = 'f32[16,1]{1,0:T(8,128)}', space=vmem, size = 0x2000, scoped, tag = 'scratch operand']
  #allocation4 [shape = 'f32[8,1]{1,0:T(8,128)}', space=vmem, size = 0x1000, scoped, tag = 'scratch operand']
  #allocation5 [shape = 'f32[8,1]{1,0:T(8,128)}', space=vmem, size = 0x1000, scoped, tag = 'scratch operand']
  #allocation6 [shape = 'f32[1,16,512]{2,1,0:T(8,128)}', space=vmem, size = 0x8000, scoped, tag = 'scratch operand']
  #allocation7 [shape = 'f32[1,8,512]{2,1,0:T(8,128)}', space=vmem, size = 0x4000, scoped, tag = 'scratch operand']
  %s0 = inlined_call_operand.hbm [shape: bf16[32,512], index: 0, kind: input, shape index: {}]
  %s1 = inlined_call_operand.vmem [shape: bf16[16,32], index: 1, kind: input, shape index: {}]
  %s2 = inlined_call_operand.vmem [shape: f32[16,1], index: 2, kind: input, shape index: {}]
  %s3 = inlined_call_operand.vmem [shape: f32[16,1], index: 3, kind: input, shape index: {}]
  %s4 = inlined_call_operand.vmem [shape: bf16[8,16], index: 4, kind: input, shape index: {}]
  %s5 = inlined_call_operand.vmem [shape: f32[8,1], index: 5, kind: input, shape index: {}]
  %s6 = inlined_call_operand.vmem [shape: f32[8,1], index: 6, kind: input, shape index: {}]
  %s7 = inlined_call_operand.hbm [shape: f32[8,512], index: 7, kind: output, shape index: {}]
  %s8 = sld [smem:[#allocation0]]
  $region85: #{tpu_custom_call.1} parent=0
    _
  %s10 = ssub.s32 1, %s8
  %s11 = scalar_select 0, %s10, %s8
  $region1: #{tpu_custom_call.1} parent=0
    #allocation8 [shape = 'u8[65536]{0}', space=vmem, size = 0x10000, scoped, tag = 'input window, operand 0']
    #allocation9 [shape = 's32[2]{0}', space=sflag, size = 0x8, scoped, tag = 'scoped memory for tpu_custom_call.1']
    #allocation10 [shape = 's32[2]{0}', space=sflag, size = 0x8, scoped, tag = 'scoped memory for tpu_custom_call.1']
    #allocation11 [shape = 'u8[32768]{0}', space=vmem, size = 0x8000, scoped, tag = 'output window, operand 0']
    %12 = vsyncpa [#allocation9], 0
    %s13 = scalar_lea.sflag [#allocation9], 1
    %14 = vsyncpa %s13, 0
    %15 = vsyncpa [#allocation10], 0
    %s16 = scalar_lea.sflag [#allocation10], 1
    %17 = vsyncpa %s16, 0
    loop: start=0, step=1, limit=5
    $region2: #{tpu_custom_call.1} parent=1 // loop_pre_header
      _
    $region3: #{tpu_custom_call.1} parent=1 // loop_header
      %s19 = sphi 0, %s23
      %p20 = scmp.ge.s32.totalorder %s19, 5
      %s26 = sphi 0, %s38
      %s27 = sphi 0, %s34
      %s28 = sphi 0, %s26
      %s29 = sphi 0, %s27
      %s30 = sphi 0, %s28
      %s31 = sphi 0, %s29
      %s45 = sphi 0, %s47
      %s48 = sphi 0, %s45
      %s49 = sphi 0, %s48
      %s65 = sphi 0, %s49
      %s69 = sphi 0, %s69
      %s71 = sphi 0, %s69
      %s72 = sphi 0, %s71
      %s86 = sphi 0, %s72
      %s90 = sphi 0, %s90
      %s92 = sphi 0, %s90
      %s93 = sphi 0, %s92
      %s107 = sphi 0, %s93
      %s111 = sphi 0, %s111
      %s113 = sphi 0, %s111
      %s114 = sphi 0, %s113
      %s128 = sphi 0, %s114
      %s132 = sphi 0, %s132
      %s134 = sphi 0, %s132
      %s135 = sphi 0, %s134
      %s149 = sphi 0, %s135
      %s153 = sphi 0, %s153
      %s155 = sphi 0, %s153
      %s156 = sphi 0, %s155
      %s170 = sphi 0, %s156
      %s174 = sphi 0, %s174
      %s176 = sphi 0, %s174
      %s177 = sphi 0, %s176
      %s191 = sphi 0, %s177
      %s201 = sphi 0, %s203
      %s204 = sphi 0, %s201
      %s205 = sphi 0, %s204
      %s221 = sphi 0, %s205
    $region4: #{tpu_custom_call.1} parent=1 // loop_header_branch
      %22 = sbr.rel (%p20) target = $region8
    $region5: #{tpu_custom_call.1} parent=1 // loop_body
      %s24 = ssub.s32 %s19, 1
      %s25 = ssub.s32 %s19, 2
      %s32 = sadd.s32 1, %s27
      %p33 = scmp.ge.s32.totalorder %s32, 1
      %s34 = scalar_select %p33, 0, %s32
      %s35 = sadd.s32 1, %s26
      %s36 = scalar_select %p33, %s35, %s26
      %p37 = scmp.ge.s32.totalorder %s36, 3
      %s38 = scalar_select %p37, 0, %s36
      %p39 = scmp.eq.s32.totalorder %s26, 0
      %s40 = scalar_select %p39, %s27, 0
      %p41 = scmp.eq.s32.totalorder %s38, 0
      %s42 = scalar_select %p41, %s34, 0
      %s43 = ssub.s32 %s40, %s42
      %p44 = scmp.eq.s32.totalorder %s43, 0
      %s46 = sadd.s32 %s45, 1
      %s47 = scalar_select %p44, %s45, %s46
      %p50 = pneg %p44
      %p51 = scmp.eq.s32.totalorder %s19, 2
      %p52 = por %p50, %p51
      %p53 = scmp.ne.s32.totalorder %s45, %s48
      %p54 = scmp.eq.s32.totalorder %s19, 0
      %p55 = por %p53, %p54
      %p56 = scmp.ne.s32.totalorder %s45, %s48
      %p57 = scmp.eq.s32.totalorder %s24, 2
      %p58 = por %p56, %p57
      %p59 = scmp.ne.s32.totalorder %s48, %s49
      %p60 = scmp.eq.s32.totalorder %s24, 0
      %p61 = por %p59, %p60
      %p62 = scmp.ne.s32.totalorder %s48, %s49
      %p63 = scmp.eq.s32.totalorder %s25, 2
      %p64 = por %p62, %p63
      %p66 = scmp.ne.s32.totalorder %s49, %s65
      %p67 = scmp.eq.s32.totalorder %s25, 0
      %p68 = por %p66, %p67
      %s70 = sadd.s32 %s69, 1
      %p73 = scmp.eq.s32.totalorder %s19, 2
      %p74 = scmp.ne.s32.totalorder %s69, %s71
      %p75 = scmp.eq.s32.totalorder %s19, 0
      %p76 = por %p74, %p75
      %p77 = scmp.ne.s32.totalorder %s69, %s71
      %p78 = scmp.eq.s32.totalorder %s24, 2
      %p79 = por %p77, %p78
      %p80 = scmp.ne.s32.totalorder %s71, %s72
      %p81 = scmp.eq.s32.totalorder %s24, 0
      %p82 = por %p80, %p81
      %p83 = scmp.ne.s32.totalorder %s71, %s72
      %p84 = scmp.eq.s32.totalorder %s25, 2
      %p85 = por %p83, %p84
      %p87 = scmp.ne.s32.totalorder %s72, %s86
      %p88 = scmp.eq.s32.totalorder %s25, 0
      %p89 = por %p87, %p88
      %s91 = sadd.s32 %s90, 1
      %p94 = scmp.eq.s32.totalorder %s19, 2
      %p95 = scmp.ne.s32.totalorder %s90, %s92
      %p96 = scmp.eq.s32.totalorder %s19, 0
      %p97 = por %p95, %p96
      %p98 = scmp.ne.s32.totalorder %s90, %s92
      %p99 = scmp.eq.s32.totalorder %s24, 2
      %p100 = por %p98, %p99
      %p101 = scmp.ne.s32.totalorder %s92, %s93
      %p102 = scmp.eq.s32.totalorder %s24, 0
      %p103 = por %p101, %p102
      %p104 = scmp.ne.s32.totalorder %s92, %s93
      %p105 = scmp.eq.s32.totalorder %s25, 2
      %p106 = por %p104, %p105
      %p108 = scmp.ne.s32.totalorder %s93, %s107
      %p109 = scmp.eq.s32.totalorder %s25, 0
      %p110 = por %p108, %p109
      %s112 = sadd.s32 %s111, 1
      %p115 = scmp.eq.s32.totalorder %s19, 2
      %p116 = scmp.ne.s32.totalorder %s111, %s113
      %p117 = scmp.eq.s32.totalorder %s19, 0
      %p118 = por %p116, %p117
      %p119 = scmp.ne.s32.totalorder %s111, %s113
      %p120 = scmp.eq.s32.totalorder %s24, 2
      %p121 = por %p119, %p120
      %p122 = scmp.ne.s32.totalorder %s113, %s114
      %p123 = scmp.eq.s32.totalorder %s24, 0
      %p124 = por %p122, %p123
      %p125 = scmp.ne.s32.totalorder %s113, %s114
      %p126 = scmp.eq.s32.totalorder %s25, 2
      %p127 = por %p125, %p126
      %p129 = scmp.ne.s32.totalorder %s114, %s128
      %p130 = scmp.eq.s32.totalorder %s25, 0
      %p131 = por %p129, %p130
      %s133 = sadd.s32 %s132, 1
      %p136 = scmp.eq.s32.totalorder %s19, 2
      %p137 = scmp.ne.s32.totalorder %s132, %s134
      %p138 = scmp.eq.s32.totalorder %s19, 0
      %p139 = por %p137, %p138
      %p140 = scmp.ne.s32.totalorder %s132, %s134
      %p141 = scmp.eq.s32.totalorder %s24, 2
      %p142 = por %p140, %p141
      %p143 = scmp.ne.s32.totalorder %s134, %s135
      %p144 = scmp.eq.s32.totalorder %s24, 0
      %p145 = por %p143, %p144
      %p146 = scmp.ne.s32.totalorder %s134, %s135
      %p147 = scmp.eq.s32.totalorder %s25, 2
      %p148 = por %p146, %p147
      %p150 = scmp.ne.s32.totalorder %s135, %s149
      %p151 = scmp.eq.s32.totalorder %s25, 0
      %p152 = por %p150, %p151
      %s154 = sadd.s32 %s153, 1
      %p157 = scmp.eq.s32.totalorder %s19, 2
      %p158 = scmp.ne.s32.totalorder %s153, %s155
      %p159 = scmp.eq.s32.totalorder %s19, 0
      %p160 = por %p158, %p159
      %p161 = scmp.ne.s32.totalorder %s153, %s155
      %p162 = scmp.eq.s32.totalorder %s24, 2
      %p163 = por %p161, %p162
      %p164 = scmp.ne.s32.totalorder %s155, %s156
      %p165 = scmp.eq.s32.totalorder %s24, 0
      %p166 = por %p164, %p165
      %p167 = scmp.ne.s32.totalorder %s155, %s156
      %p168 = scmp.eq.s32.totalorder %s25, 2
      %p169 = por %p167, %p168
      %p171 = scmp.ne.s32.totalorder %s156, %s170
      %p172 = scmp.eq.s32.totalorder %s25, 0
      %p173 = por %p171, %p172
      %s175 = sadd.s32 %s174, 1
      %p178 = scmp.eq.s32.totalorder %s19, 2
      %p179 = scmp.ne.s32.totalorder %s174, %s176
      %p180 = scmp.eq.s32.totalorder %s19, 0
      %p181 = por %p179, %p180
      %p182 = scmp.ne.s32.totalorder %s174, %s176
      %p183 = scmp.eq.s32.totalorder %s24, 2
      %p184 = por %p182, %p183
      %p185 = scmp.ne.s32.totalorder %s176, %s177
      %p186 = scmp.eq.s32.totalorder %s24, 0
      %p187 = por %p185, %p186
      %p188 = scmp.ne.s32.totalorder %s176, %s177
      %p189 = scmp.eq.s32.totalorder %s25, 2
      %p190 = por %p188, %p189
      %p192 = scmp.ne.s32.totalorder %s177, %s191
      %p193 = scmp.eq.s32.totalorder %s25, 0
      %p194 = por %p192, %p193
      %p195 = scmp.eq.s32.totalorder %s26, 2
      %s196 = scalar_select %p195, %s27, 0
      %p197 = scmp.eq.s32.totalorder %s38, 2
      %s198 = scalar_select %p197, %s34, 0
      %s199 = ssub.s32 %s196, %s198
      %p200 = scmp.eq.s32.totalorder %s199, 0
      %s202 = sadd.s32 %s201, 1
      %s203 = scalar_select %p200, %s201, %s202
      %p206 = pneg %p200
      %p207 = scmp.eq.s32.totalorder %s19, 2
      %p208 = por %p206, %p207
      %p209 = scmp.ne.s32.totalorder %s201, %s204
      %p210 = scmp.eq.s32.totalorder %s19, 0
      %p211 = por %p209, %p210
      %p212 = scmp.ne.s32.totalorder %s201, %s204
      %p213 = scmp.eq.s32.totalorder %s24, 2
      %p214 = por %p212, %p213
      %p215 = scmp.ne.s32.totalorder %s204, %s205
      %p216 = scmp.eq.s32.totalorder %s24, 0
      %p217 = por %p215, %p216
      %p218 = scmp.ne.s32.totalorder %s204, %s205
      %p219 = scmp.eq.s32.totalorder %s25, 2
      %p220 = por %p218, %p219
      %p222 = scmp.ne.s32.totalorder %s205, %s221
      %p223 = scmp.eq.s32.totalorder %s25, 0
      %p224 = por %p222, %p223
      %p225 = scmp.le.s32.totalorder 1, %s19
      %p226 = scmp.lt.s32.totalorder %s19, 4
      %p227 = pnand %p225, %p226
      %p228 = pneg %p227
      // Predicated region
      $region9: #{tpu_custom_call.1} parent=5 // pred_check
        _
      $region10: #{tpu_custom_call.1} parent=5 // pred_check_branch
        %230 = sbr.rel (%p227) target = $region12
      $region11: #{tpu_custom_call.1} parent=5 // pred_region
        %s231 = ssub.s32 %s19, 1
        // Predicated region
        $region13: #{tpu_custom_call.1} parent=11 // pred_check
          %p232 = pneg %p82
        $region14: #{tpu_custom_call.1} parent=11 // pred_check_branch
          %234 = sbr.rel (%p232) target = $region16
        $region15: #{tpu_custom_call.1} parent=11 // pred_region
          _
        $region16: #{tpu_custom_call.1} parent=11 // pred_fallthru
          _
        // Predicated region
        $region17: #{tpu_custom_call.1} parent=11 // pred_check
          %p235 = pneg %p103
        $region18: #{tpu_custom_call.1} parent=11 // pred_check_branch
          %237 = sbr.rel (%p235) target = $region20
        $region19: #{tpu_custom_call.1} parent=11 // pred_region
          _
        $region20: #{tpu_custom_call.1} parent=11 // pred_fallthru
          _
        // Predicated region
        $region21: #{tpu_custom_call.1} parent=11 // pred_check
          %p238 = pneg %p124
        $region22: #{tpu_custom_call.1} parent=11 // pred_check_branch
          %240 = sbr.rel (%p238) target = $region24
        $region23: #{tpu_custom_call.1} parent=11 // pred_region
          _
        $region24: #{tpu_custom_call.1} parent=11 // pred_fallthru
          _
        // Predicated region
        $region25: #{tpu_custom_call.1} parent=11 // pred_check
          %p241 = pneg %p145
        $region26: #{tpu_custom_call.1} parent=11 // pred_check_branch
          %243 = sbr.rel (%p241) target = $region28
        $region27: #{tpu_custom_call.1} parent=11 // pred_region
          _
        $region28: #{tpu_custom_call.1} parent=11 // pred_fallthru
          _
        // Predicated region
        $region29: #{tpu_custom_call.1} parent=11 // pred_check
          %p244 = pneg %p166
        $region30: #{tpu_custom_call.1} parent=11 // pred_check_branch
          %246 = sbr.rel (%p244) target = $region32
        $region31: #{tpu_custom_call.1} parent=11 // pred_region
          _
        $region32: #{tpu_custom_call.1} parent=11 // pred_fallthru
          _
        // Predicated region
        $region33: #{tpu_custom_call.1} parent=11 // pred_check
          %p247 = pneg %p187
        $region34: #{tpu_custom_call.1} parent=11 // pred_check_branch
          %249 = sbr.rel (%p247) target = $region36
        $region35: #{tpu_custom_call.1} parent=11 // pred_region
          _
        $region36: #{tpu_custom_call.1} parent=11 // pred_fallthru
          _
      $region12: #{tpu_custom_call.1} parent=5 // pred_fallthru
        _
      %p250 = scmp.lt.s32.totalorder %s19, 3
      // Predicated region
      $region37: #{tpu_custom_call.1} parent=5 // pred_check
        %p251 = pneg %p250
      $region38: #{tpu_custom_call.1} parent=5 // pred_check_branch
        %253 = sbr.rel (%p251) target = $region40
      $region39: #{tpu_custom_call.1} parent=5 // pred_region
        // Predicated region
        $region41: #{tpu_custom_call.1} parent=39 // pred_check
          %p254 = pneg %p55
        $region42: #{tpu_custom_call.1} parent=39 // pred_check_branch
          %256 = sbr.rel (%p254) target = $region44
        $region43: #{tpu_custom_call.1} parent=39 // pred_region
          %s257 = sand.u32 %s45, 1
          %s258 = scalar_lea.sflag [#allocation9], %s257
          %s259 = sand.u32 %s45, 1
          %s260 = smul.addr %s259, 64
          %s261 = scalar_lea.vmem [#allocation8], %s260
          %p262 = scmp.eq.s32.totalorder %s26, 0
          %s263 = scalar_select %p262, %s27, 0
          %s264 = smul.u32 4, %s263
          %s266 = ssub.s32 1024, 1024
          %267 = vsyncadd %s258, %s266
          %s268 = smul.addr %s264, 64
          %s269 = scalar_lea.hbm %s0, %s268
          %s270 = sshll.u32 %s261, 4
          %s271 = int_to_ptr.vmem [resolvable:$true] %s270
          %276 = dma.hbm_to_vmem [thread:$0]  %s269, 1024, %s271, %s258, 256, 256, 16
        $region44: #{tpu_custom_call.1} parent=39 // pred_fallthru
          _
      $region40: #{tpu_custom_call.1} parent=5 // pred_fallthru
        _
      %p277 = scmp.le.s32.totalorder 1, %s19
      %p278 = scmp.lt.s32.totalorder %s19, 4
      %p279 = pnand %p277, %p278
      %p280 = pneg %p279
      // Predicated region
      $region45: #{tpu_custom_call.1} parent=5 // pred_check
        _
      $region46: #{tpu_custom_call.1} parent=5 // pred_check_branch
        %282 = sbr.rel (%p279) target = $region48
      $region47: #{tpu_custom_call.1} parent=5 // pred_region
        %s283 = ssub.s32 %s19, 1
        %s284 = sand.u32 %s48, 1
        %s285 = scalar_lea.sflag [#allocation9], %s284
        %s286 = sand.u32 %s48, 1
        %s287 = smul.addr %s286, 64
        %s288 = scalar_lea.vmem [#allocation8], %s287
        // Predicated region
        $region49: #{tpu_custom_call.1} parent=47 // pred_check
          %p289 = pneg %p61
        $region50: #{tpu_custom_call.1} parent=47 // pred_check_branch
          %291 = sbr.rel (%p289) target = $region52
        $region51: #{tpu_custom_call.1} parent=47 // pred_region
          %292 = dma.done %s285, 1024
        $region52: #{tpu_custom_call.1} parent=47 // pred_fallthru
          _
        %s293 = sand.u32 %s48, 1
        %s294 = scalar_lea.sflag [#allocation9], %s293
        %s295 = sand.u32 %s48, 1
        %s296 = smul.addr %s295, 64
        %s297 = scalar_lea.vmem [#allocation8], %s296
        %p298 = pneg %p61
        %p299 = pneg %p58
        %p300 = pneg %p82
        %p301 = pneg %p79
        %p302 = pneg %p103
        %p303 = pneg %p100
        %p304 = pneg %p124
        %p305 = pneg %p121
        %p306 = pneg %p145
        %p307 = pneg %p142
        %p308 = pneg %p166
        %p309 = pneg %p163
        %p310 = pneg %p187
        %p311 = pneg %p184
        %p312 = pneg %p217
        %p313 = pneg %p214
        %s314 = sand.u32 %s204, 1
        %s315 = scalar_lea.sflag [#allocation10], %s314
        %s316 = sand.u32 %s204, 1
        %s317 = smul.addr %s316, 32
        %s318 = scalar_lea.vmem [#allocation11], %s317
        %p319 = scmp.eq.s32.totalorder %s28, 0
        %s320 = scalar_select %p319, %s29, 0
        %s321 = smul.u32 4, %s320
        %p322 = scmp.eq.s32.totalorder %s28, 2
        %s323 = scalar_select %p322, %s29, 0
        %s324 = smul.u32 4, %s323
        %p326 = scmp.eq.s32.totalorder %s28, 0
        %p327 = scmp.eq.s32.totalorder %s29, 0
        %p328 = pnand %p326, %p327
        %p329 = pneg %p328
        // Predicated region
        $region53: #{tpu_custom_call.1} parent=47 // pred_check
          _
        $region54: #{tpu_custom_call.1} parent=47 // pred_check_branch
          %331 = sbr.rel (%p328) target = $region56
        $region55: #{tpu_custom_call.1} parent=47 // pred_region
          %vm332 = vcmask 7168
          %333 = vst.msk [vmem:[#allocation2] sm:$0xff] %vm332, 0.0
          %334 = vst.msk [vmem:[#allocation2 + $0x8] sm:$0xff] %vm332, 0.0
          %335 = vst.msk [vmem:[#allocation3] sm:$0xff] %vm332, 0.0
          %336 = vst.msk [vmem:[#allocation3 + $0x8] sm:$0xff] %vm332, 0.0
        $region56: #{tpu_custom_call.1} parent=47 // pred_fallthru
          _
        // Predicated region
        $region57: #{tpu_custom_call.1} parent=47 // pred_check
          %p337 = pneg %p326
        $region58: #{tpu_custom_call.1} parent=47 // pred_check_branch
          %339 = sbr.rel (%p337) target = $region60
        $region59: #{tpu_custom_call.1} parent=47 // pred_region
          %v340 = vld [vmem:[%s1] sm:$0xf]
          %v341 = vld [vmem:[%s1 + $0x4] sm:$0xf]
          %v342 = vld [vmem:[%s288] sm:$0xff]
          %v343 = vld [vmem:[%s288 + $0x8] sm:$0xff]
          %v344 = vld [vmem:[%s288 + $0x10] sm:$0xff]
          %v345 = vld [vmem:[%s288 + $0x18] sm:$0xff]
          %v346 = vld [vmem:[%s288 + $0x20] sm:$0xff]
          %v347 = vld [vmem:[%s288 + $0x28] sm:$0xff]
          %v348 = vld [vmem:[%s288 + $0x30] sm:$0xff]
          %v349 = vld [vmem:[%s288 + $0x38] sm:$0xff]
          %v352 = vunpack.c.l.b16 %v340
          %v353 = vunpack.c.l.b16 %v341
          %v354 = vpack.c.b16 %v353, %v352
          %v363 = vunpack.c.l.b16 %v342
          %v364 = vunpack.c.h.b16 %v342
          %v365 = vunpack.c.l.b16 %v343
          %v366 = vunpack.c.h.b16 %v343
          %v367 = vunpack.c.l.b16 %v344
          %v368 = vunpack.c.h.b16 %v344
          %v369 = vunpack.c.l.b16 %v345
          %v370 = vunpack.c.h.b16 %v345
          %v371 = vunpack.c.l.b16 %v346
          %v372 = vunpack.c.h.b16 %v346
          %v373 = vunpack.c.l.b16 %v347
          %v374 = vunpack.c.h.b16 %v347
          %v375 = vunpack.c.l.b16 %v348
          %v376 = vunpack.c.h.b16 %v348
          %v377 = vunpack.c.l.b16 %v349
          %v378 = vunpack.c.h.b16 %v349
          %v379 = vpack.c.b16 %v367, %v363
          %v380 = vpack.c.b16 %v368, %v364
          %v381 = vpack.c.b16 %v369, %v365
          %v382 = vpack.c.b16 %v370, %v366
          %v383 = vpack.c.b16 %v375, %v371
          %v384 = vpack.c.b16 %v376, %v372
          %v385 = vpack.c.b16 %v377, %v373
          %v386 = vpack.c.b16 %v378, %v374
          %vm395 = vcmask 261120
          %v397 = vsel %vm395, %v354, 0
          %399 = vmatprep.subr.bf16.mxu0 %v380
          %400 = vmatpush1.bf16.msra.mxu0 %v379
          %401 = vmatprep.subr.bf16.mxu0 %v384
          %402 = vmatpush1.bf16.msra.mxu0 %v383
          %403 = vmatprep.subr.bf16.mxu0 0
          %404 = vmatpush1.bf16.msra.mxu0 0
          %405 = vmatprep.subr.bf16.mxu0 0
          %406 = vmatpush1.bf16.msra.mxu0 0
          %407 = vmatprep.subr.bf16.mxu0 0
          %408 = vmatpush1.bf16.msra.mxu0 0
          %409 = vmatprep.subr.bf16.mxu0 0
          %410 = vmatpush1.bf16.msra.mxu0 0
          %411 = vmatprep.subr.bf16.mxu0 0
          %412 = vmatpush1.bf16.msra.mxu0 0
          %413 = vmatprep.subr.bf16.mxu0 0
          %414 = vmatpush1.bf16.msra.mxu0 0
          %415 = vmatprep.subr.bf16.mxu0 0
          %416 = vmatpush1.bf16.msra.mxu0 0
          %417 = vmatprep.subr.bf16.mxu0 0
          %418 = vmatpush1.bf16.msra.mxu0 0
          %419 = vmatprep.subr.bf16.mxu0 0
          %420 = vmatpush1.bf16.msra.mxu0 0
          %421 = vmatprep.subr.bf16.mxu0 0
          %422 = vmatpush1.bf16.msra.mxu0 0
          %423 = vmatprep.subr.bf16.mxu0 0
          %424 = vmatpush1.bf16.msra.mxu0 0
          %425 = vmatprep.subr.bf16.mxu0 0
          %426 = vmatpush1.bf16.msra.mxu0 0
          %427 = vmatprep.subr.bf16.mxu0 0
          %428 = vmatpush1.bf16.msra.mxu0 0
          %429 = vmatprep.subr.bf16.mxu0 0
          %430 = vmatpush1.bf16.msra.mxu0 0
          %431 = vmatprep.mubr.bf16.mxu0 0
          %432 = vmatmul.mubr.bf16.gmra.mrb[0].mxu0 %v397
          %v433 = vpop.f32.mrb[0].mxu0
          %v434 = vadd.f32 0.0, %v433
          %v435 = vpop.f32.mrb[0].mxu0
          %v436 = vadd.f32 0.0, %v435
          %v437 = vpop.f32.mrb[0].mxu0
          %v438 = vadd.f32 0.0, %v437
          %v439 = vpop.f32.mrb[0].mxu0
          %v440 = vadd.f32 0.0, %v439
          %441 = vdwg.mxu0
          %442 = vmatprep.subr.bf16.mxu0 %v382
          %443 = vmatpush1.bf16.msra.mxu0 %v381
          %444 = vmatprep.subr.bf16.mxu0 %v386
          %445 = vmatpush1.bf16.msra.mxu0 %v385
          %446 = vmatprep.subr.bf16.mxu0 0
          %447 = vmatpush1.bf16.msra.mxu0 0
          %448 = vmatprep.subr.bf16.mxu0 0
          %449 = vmatpush1.bf16.msra.mxu0 0
          %450 = vmatprep.subr.bf16.mxu0 0
          %451 = vmatpush1.bf16.msra.mxu0 0
          %452 = vmatprep.subr.bf16.mxu0 0
          %453 = vmatpush1.bf16.msra.mxu0 0
          %454 = vmatprep.subr.bf16.mxu0 0
          %455 = vmatpush1.bf16.msra.mxu0 0
          %456 = vmatprep.subr.bf16.mxu0 0
          %457 = vmatpush1.bf16.msra.mxu0 0
          %458 = vmatprep.subr.bf16.mxu0 0
          %459 = vmatpush1.bf16.msra.mxu0 0
          %460 = vmatprep.subr.bf16.mxu0 0
          %461 = vmatpush1.bf16.msra.mxu0 0
          %462 = vmatprep.subr.bf16.mxu0 0
          %463 = vmatpush1.bf16.msra.mxu0 0
          %464 = vmatprep.subr.bf16.mxu0 0
          %465 = vmatpush1.bf16.msra.mxu0 0
          %466 = vmatprep.subr.bf16.mxu0 0
          %467 = vmatpush1.bf16.msra.mxu0 0
          %468 = vmatprep.subr.bf16.mxu0 0
          %469 = vmatpush1.bf16.msra.mxu0 0
          %470 = vmatprep.subr.bf16.mxu0 0
          %471 = vmatpush1.bf16.msra.mxu0 0
          %472 = vmatprep.subr.bf16.mxu0 0
          %473 = vmatpush1.bf16.msra.mxu0 0
          %474 = vmatprep.mubr.bf16.mxu0 0
          %475 = vmatmul.mubr.bf16.gmra.mrb[0].mxu0 %v397
          %v476 = vpop.f32.mrb[0].mxu0
          %v477 = vadd.f32 0.0, %v476
          %v478 = vpop.f32.mrb[0].mxu0
          %v479 = vadd.f32 0.0, %v478
          %v480 = vpop.f32.mrb[0].mxu0
          %v481 = vadd.f32 0.0, %v480
          %v482 = vpop.f32.mrb[0].mxu0
          %v483 = vadd.f32 0.0, %v482
          %484 = vdwg.mxu0
          %s485 = smul.u32 %s29, 8
          %s486 = smul.addr %s485, 8
          %s487 = scalar_lea.vmem [#allocation6], %s486
          %488 = vst [vmem:[%s487] sm:$0xff] %v434
          %489 = vst [vmem:[%s487 + $0x8] sm:$0xff] %v436
          %490 = vst [vmem:[%s487 + $0x10] sm:$0xff] %v477
          %491 = vst [vmem:[%s487 + $0x18] sm:$0xff] %v479
          %492 = vst [vmem:[%s487 + $0x20] sm:$0xff] %v438
          %493 = vst [vmem:[%s487 + $0x28] sm:$0xff] %v440
          %494 = vst [vmem:[%s487 + $0x30] sm:$0xff] %v481
          %495 = vst [vmem:[%s487 + $0x38] sm:$0xff] %v483
          %v496 = vld [vmem:[#allocation2] sm:$0xff]
          %v497 = vld [vmem:[#allocation2 + $0x8] sm:$0xff]
          %v498 = vadd.f32 %v434, %v436
          %v499 = vadd.f32 %v498, %v477
          %v500 = vadd.f32 %v499, %v479
          %501 = vadd.xlane.f32.xlu0 %v500
          %v502 = vpop.xlane.xlu0 %501
          %v503 = vadd.f32 %v438, %v440
          %v504 = vadd.f32 %v503, %v481
          %v505 = vadd.f32 %v504, %v483
          %506 = vadd.xlane.f32.xlu0 %v505
          %v507 = vpop.xlane.xlu0 %506
          %v508 = vadd.f32 %v496, %v502
          %v509 = vadd.f32 %v497, %v507
          %vm510 = vcmask 7168
          %511 = vst.msk [vmem:[#allocation2] sm:$0xff] %vm510, %v508
          %512 = vst.msk [vmem:[#allocation2 + $0x8] sm:$0xff] %vm510, %v509
          %v513 = vld [vmem:[#allocation3] sm:$0xff]
          %v514 = vld [vmem:[#allocation3 + $0x8] sm:$0xff]
          %v515 = vmul.f32 %v434, %v434
          %v516 = vmul.f32 %v436, %v436
          %v517 = vmul.f32 %v477, %v477
          %v518 = vmul.f32 %v479, %v479
          %v519 = vmul.f32 %v438, %v438
          %v520 = vmul.f32 %v440, %v440
          %v521 = vmul.f32 %v481, %v481
          %v522 = vmul.f32 %v483, %v483
          %v523 = vadd.f32 %v515, %v516
          %v524 = vadd.f32 %v523, %v517
          %v525 = vadd.f32 %v524, %v518
          %526 = vadd.xlane.f32.xlu0 %v525
          %v527 = vpop.xlane.xlu0 %526
          %v528 = vadd.f32 %v519, %v520
          %v529 = vadd.f32 %v528, %v521
          %v530 = vadd.f32 %v529, %v522
          %531 = vadd.xlane.f32.xlu0 %v530
          %v532 = vpop.xlane.xlu0 %531
          %v533 = vadd.f32 %v513, %v527
          %v534 = vadd.f32 %v514, %v532
          %535 = vst.msk [vmem:[#allocation3] sm:$0xff] %vm510, %v533
          %536 = vst.msk [vmem:[#allocation3 + $0x8] sm:$0xff] %vm510, %v534
        $region60: #{tpu_custom_call.1} parent=47 // pred_fallthru
          _
        %p537 = scmp.eq.s32.totalorder %s28, 1
        %p538 = pnand %p537, %p327
        %p539 = pneg %p538
        // Predicated region
        $region61: #{tpu_custom_call.1} parent=47 // pred_check
          _
        $region62: #{tpu_custom_call.1} parent=47 // pred_check_branch
          %541 = sbr.rel (%p538) target = $region64
        $region63: #{tpu_custom_call.1} parent=47 // pred_region
          %vm542 = vcmask 7168
          %543 = vst.msk [vmem:[#allocation4] sm:$0xff] %vm542, 0.0
          %544 = vst.msk [vmem:[#allocation5] sm:$0xff] %vm542, 0.0
        $region64: #{tpu_custom_call.1} parent=47 // pred_fallthru
          _
        // Predicated region
        $region65: #{tpu_custom_call.1} parent=47 // pred_check
          %p545 = pneg %p537
        $region66: #{tpu_custom_call.1} parent=47 // pred_check_branch
          %547 = sbr.rel (%p545) target = $region68
        $region67: #{tpu_custom_call.1} parent=47 // pred_region
          %v548 = vld [vmem:[%s4] sm:$0xf]
          %s549 = smul.u32 %s29, 8
          %s550 = smul.addr %s549, 8
          %s551 = scalar_lea.vmem [#allocation6], %s550
          %v552 = vld [vmem:[%s551] sm:$0xff]
          %v553 = vld [vmem:[%s551 + $0x8] sm:$0xff]
          %v554 = vld [vmem:[%s551 + $0x10] sm:$0xff]
          %v555 = vld [vmem:[%s551 + $0x18] sm:$0xff]
          %v556 = vld [vmem:[%s551 + $0x20] sm:$0xff]
          %v557 = vld [vmem:[%s551 + $0x28] sm:$0xff]
          %v558 = vld [vmem:[%s551 + $0x30] sm:$0xff]
          %v559 = vld [vmem:[%s551 + $0x38] sm:$0xff]
          %v560 = vld [vmem:[#allocation2] sm:$0xff]
          %v561 = vld [vmem:[#allocation2 + $0x8] sm:$0xff]
          %v562 = vmul.f32 %v560, 0.001953125
          %v563 = vmul.f32 %v561, 0.001953125
          %v564 = vld [vmem:[#allocation3] sm:$0xff]
          %v565 = vld [vmem:[#allocation3 + $0x8] sm:$0xff]
          %v566 = vmul.f32 %v564, 0.001953125
          %v567 = vmul.f32 %v565, 0.001953125
          %v568 = vmul.f32 %v562, %v562
          %v569 = vmul.f32 %v563, %v563
          %v570 = vsub.f32 %v566, %v568
          %v571 = vsub.f32 %v567, %v569
          %v572 = vmax.f32 %v570, 0.0
          %v573 = vmax.f32 %v571, 0.0
          %v574 = vld [vmem:[%s2] sm:$0xff]
          %v575 = vld [vmem:[%s2 + $0x8] sm:$0xff]
          %v576 = vadd.f32 %v572, 1e-05
          %v577 = vadd.f32 %v573, 1e-05
          %v578 = vrsqrt.pop %v576
          %v579 = vrsqrt.pop %v577
          %v580 = vmul.f32 %v574, %v578
          %v581 = vmul.f32 %v575, %v579
          %v582 = vld [vmem:[%s3] sm:$0xff]
          %v583 = vld [vmem:[%s3 + $0x8] sm:$0xff]
          %v584 = vmul.f32 %v562, %v580
          %v585 = vmul.f32 %v563, %v581
          %v586 = vsub.f32 %v582, %v584
          %v587 = vsub.f32 %v583, %v585
          %589 = vset.pattern.permute.xlu0 0
          %590 = vperm.xlu0 %589, %v580
          %v591 = vpop.permute.xlu0 %590
          %594 = vset.pattern.permute.xlu0 0
          %595 = vperm.xlu0 %594, %v581
          %v596 = vpop.permute.xlu0 %595
          %v598 = vmul.f32 %v552, %v591
          %v599 = vmul.f32 %v553, %v591
          %v600 = vmul.f32 %v554, %v591
          %v601 = vmul.f32 %v555, %v591
          %v602 = vmul.f32 %v556, %v596
          %v603 = vmul.f32 %v557, %v596
          %v604 = vmul.f32 %v558, %v596
          %v605 = vmul.f32 %v559, %v596
          %607 = vset.pattern.permute.xlu0 0
          %608 = vperm.xlu0 %607, %v586
          %v609 = vpop.permute.xlu0 %608
          %612 = vset.pattern.permute.xlu0 0
          %613 = vperm.xlu0 %612, %v587
          %v614 = vpop.permute.xlu0 %613
          %v616 = vadd.f32 %v598, %v609
          %v617 = vadd.f32 %v599, %v609
          %v618 = vadd.f32 %v600, %v609
          %v619 = vadd.f32 %v601, %v609
          %v620 = vadd.f32 %v602, %v614
          %v621 = vadd.f32 %v603, %v614
          %v622 = vadd.f32 %v604, %v614
          %v623 = vadd.f32 %v605, %v614
          %v624 = vmax.f32 %v616, 0.0
          %v625 = vmax.f32 %v617, 0.0
          %v626 = vmax.f32 %v618, 0.0
          %v627 = vmax.f32 %v619, 0.0
          %v628 = vmax.f32 %v620, 0.0
          %v629 = vmax.f32 %v621, 0.0
          %v630 = vmax.f32 %v622, 0.0
          %v631 = vmax.f32 %v623, 0.0
          %v632 = vpack.c.bf16 %v628, %v624
          %v633 = vpack.c.bf16 %v629, %v625
          %v634 = vpack.c.bf16 %v630, %v626
          %v635 = vpack.c.bf16 %v631, %v627
          %vm636 = vcmask 130048
          %v638 = vsel %vm636, %v548, 0
          %640 = vmatprep.subr.bf16.mxu0 %v633
          %641 = vmatpush1.bf16.msra.mxu0 %v632
          %642 = vmatprep.subr.bf16.mxu0 0
          %643 = vmatpush1.bf16.msra.mxu0 0
          %644 = vmatprep.subr.bf16.mxu0 0
          %645 = vmatpush1.bf16.msra.mxu0 0
          %646 = vmatprep.subr.bf16.mxu0 0
          %647 = vmatpush1.bf16.msra.mxu0 0
          %648 = vmatprep.subr.bf16.mxu0 0
          %649 = vmatpush1.bf16.msra.mxu0 0
          %650 = vmatprep.subr.bf16.mxu0 0
          %651 = vmatpush1.bf16.msra.mxu0 0
          %652 = vmatprep.subr.bf16.mxu0 0
          %653 = vmatpush1.bf16.msra.mxu0 0
          %654 = vmatprep.subr.bf16.mxu0 0
          %655 = vmatpush1.bf16.msra.mxu0 0
          %656 = vmatprep.subr.bf16.mxu0 0
          %657 = vmatpush1.bf16.msra.mxu0 0
          %658 = vmatprep.subr.bf16.mxu0 0
          %659 = vmatpush1.bf16.msra.mxu0 0
          %660 = vmatprep.subr.bf16.mxu0 0
          %661 = vmatpush1.bf16.msra.mxu0 0
          %662 = vmatprep.subr.bf16.mxu0 0
          %663 = vmatpush1.bf16.msra.mxu0 0
          %664 = vmatprep.subr.bf16.mxu0 0
          %665 = vmatpush1.bf16.msra.mxu0 0
          %666 = vmatprep.subr.bf16.mxu0 0
          %667 = vmatpush1.bf16.msra.mxu0 0
          %668 = vmatprep.subr.bf16.mxu0 0
          %669 = vmatpush1.bf16.msra.mxu0 0
          %670 = vmatprep.subr.bf16.mxu0 0
          %671 = vmatpush1.bf16.msra.mxu0 0
          %672 = vmatprep.mubr.bf16.mxu0 0
          %673 = vmatmul.mubr.bf16.gmra.mrb[0].mxu0 %v638
          %v674 = vpop.f32.mrb[0].mxu0
          %v675 = vadd.f32 0.0, %v674
          %v676 = vpop.f32.mrb[0].mxu0
          %v677 = vadd.f32 0.0, %v676
          %v678 = vpop.f32.mrb[0].mxu0
          %v679 = vpop.f32.mrb[0].mxu0
          %680 = vdwg.mxu0
          %681 = vmatprep.subr.bf16.mxu0 %v635
          %682 = vmatpush1.bf16.msra.mxu0 %v634
          %683 = vmatprep.subr.bf16.mxu0 0
          %684 = vmatpush1.bf16.msra.mxu0 0
          %685 = vmatprep.subr.bf16.mxu0 0
          %686 = vmatpush1.bf16.msra.mxu0 0
          %687 = vmatprep.subr.bf16.mxu0 0
          %688 = vmatpush1.bf16.msra.mxu0 0
          %689 = vmatprep.subr.bf16.mxu0 0
          %690 = vmatpush1.bf16.msra.mxu0 0
          %691 = vmatprep.subr.bf16.mxu0 0
          %692 = vmatpush1.bf16.msra.mxu0 0
          %693 = vmatprep.subr.bf16.mxu0 0
          %694 = vmatpush1.bf16.msra.mxu0 0
          %695 = vmatprep.subr.bf16.mxu0 0
          %696 = vmatpush1.bf16.msra.mxu0 0
          %697 = vmatprep.subr.bf16.mxu0 0
          %698 = vmatpush1.bf16.msra.mxu0 0
          %699 = vmatprep.subr.bf16.mxu0 0
          %700 = vmatpush1.bf16.msra.mxu0 0
          %701 = vmatprep.subr.bf16.mxu0 0
          %702 = vmatpush1.bf16.msra.mxu0 0
          %703 = vmatprep.subr.bf16.mxu0 0
          %704 = vmatpush1.bf16.msra.mxu0 0
          %705 = vmatprep.subr.bf16.mxu0 0
          %706 = vmatpush1.bf16.msra.mxu0 0
          %707 = vmatprep.subr.bf16.mxu0 0
          %708 = vmatpush1.bf16.msra.mxu0 0
          %709 = vmatprep.subr.bf16.mxu0 0
          %710 = vmatpush1.bf16.msra.mxu0 0
          %711 = vmatprep.subr.bf16.mxu0 0
          %712 = vmatpush1.bf16.msra.mxu0 0
          %713 = vmatprep.mubr.bf16.mxu0 0
          %714 = vmatmul.mubr.bf16.gmra.mrb[0].mxu0 %v638
          %v715 = vpop.f32.mrb[0].mxu0
          %v716 = vadd.f32 0.0, %v715
          %v717 = vpop.f32.mrb[0].mxu0
          %v718 = vadd.f32 0.0, %v717
          %v719 = vpop.f32.mrb[0].mxu0
          %v720 = vpop.f32.mrb[0].mxu0
          %721 = vdwg.mxu0
          %s722 = smul.u32 %s29, 4
          %s723 = smul.addr %s722, 8
          %s724 = scalar_lea.vmem [#allocation7], %s723
          %725 = vst [vmem:[%s724] sm:$0xff] %v675
          %726 = vst [vmem:[%s724 + $0x8] sm:$0xff] %v677
          %727 = vst [vmem:[%s724 + $0x10] sm:$0xff] %v716
          %728 = vst [vmem:[%s724 + $0x18] sm:$0xff] %v718
          %v729 = vld [vmem:[#allocation4] sm:$0xff]
          %v730 = vadd.f32 %v675, %v677
          %v731 = vadd.f32 %v730, %v716
          %v732 = vadd.f32 %v731, %v718
          %733 = vadd.xlane.f32.xlu0 %v732
          %v734 = vpop.xlane.xlu0 %733
          %v735 = vadd.f32 %v729, %v734
          %vm736 = vcmask 7168
          %737 = vst.msk [vmem:[#allocation4] sm:$0xff] %vm736, %v735
          %v738 = vld [vmem:[#allocation5] sm:$0xff]
          %v739 = vmul.f32 %v675, %v675
          %v740 = vmul.f32 %v677, %v677
          %v741 = vmul.f32 %v716, %v716
          %v742 = vmul.f32 %v718, %v718
          %v743 = vadd.f32 %v739, %v740
          %v744 = vadd.f32 %v743, %v741
          %v745 = vadd.f32 %v744, %v742
          %746 = vadd.xlane.f32.xlu0 %v745
          %v747 = vpop.xlane.xlu0 %746
          %v748 = vadd.f32 %v738, %v747
          %749 = vst.msk [vmem:[#allocation5] sm:$0xff] %vm736, %v748
        $region68: #{tpu_custom_call.1} parent=47 // pred_fallthru
          _
        %p750 = scmp.eq.s32.totalorder %s28, 2
        // Predicated region
        $region69: #{tpu_custom_call.1} parent=47 // pred_check
          %p751 = pneg %p750
        $region70: #{tpu_custom_call.1} parent=47 // pred_check_branch
          %753 = sbr.rel (%p751) target = $region72
        $region71: #{tpu_custom_call.1} parent=47 // pred_region
          %s754 = smul.u32 %s29, 4
          %s755 = smul.addr %s754, 8
          %s756 = scalar_lea.vmem [#allocation7], %s755
          %v757 = vld [vmem:[%s756] sm:$0xff]
          %v758 = vld [vmem:[%s756 + $0x8] sm:$0xff]
          %v759 = vld [vmem:[%s756 + $0x10] sm:$0xff]
          %v760 = vld [vmem:[%s756 + $0x18] sm:$0xff]
          %v761 = vld [vmem:[#allocation4] sm:$0xff]
          %v762 = vmul.f32 %v761, 0.001953125
          %v763 = vld [vmem:[#allocation5] sm:$0xff]
          %v764 = vmul.f32 %v763, 0.001953125
          %v765 = vmul.f32 %v762, %v762
          %v766 = vsub.f32 %v764, %v765
          %v767 = vmax.f32 %v766, 0.0
          %v768 = vld [vmem:[%s5] sm:$0xff]
          %v769 = vadd.f32 %v767, 1e-05
          %v770 = vrsqrt.pop %v769
          %v771 = vmul.f32 %v768, %v770
          %v772 = vld [vmem:[%s6] sm:$0xff]
          %v773 = vmul.f32 %v762, %v771
          %v774 = vsub.f32 %v772, %v773
          %776 = vset.pattern.permute.xlu0 0
          %777 = vperm.xlu0 %776, %v771
          %v778 = vpop.permute.xlu0 %777
          %v780 = vmul.f32 %v757, %v778
          %v781 = vmul.f32 %v758, %v778
          %v782 = vmul.f32 %v759, %v778
          %v783 = vmul.f32 %v760, %v778
          %785 = vset.pattern.permute.xlu0 0
          %786 = vperm.xlu0 %785, %v774
          %v787 = vpop.permute.xlu0 %786
          %v789 = vadd.f32 %v780, %v787
          %v790 = vadd.f32 %v781, %v787
          %v791 = vadd.f32 %v782, %v787
          %v792 = vadd.f32 %v783, %v787
          %v793 = vmax.f32 %v789, 0.0
          %v794 = vmax.f32 %v790, 0.0
          %v795 = vmax.f32 %v791, 0.0
          %v796 = vmax.f32 %v792, 0.0
          %797 = vst [vmem:[%s318] sm:$0xff] %v793
          %798 = vst [vmem:[%s318 + $0x8] sm:$0xff] %v794
          %799 = vst [vmem:[%s318 + $0x10] sm:$0xff] %v795
          %800 = vst [vmem:[%s318 + $0x18] sm:$0xff] %v796
        $region72: #{tpu_custom_call.1} parent=47 // pred_fallthru
          _
        %s801 = sand.u32 %s204, 1
        %s802 = scalar_lea.sflag [#allocation10], %s801
        %s803 = sand.u32 %s204, 1
        %s804 = smul.addr %s803, 32
        %s805 = scalar_lea.vmem [#allocation11], %s804
        // Predicated region
        $region73: #{tpu_custom_call.1} parent=47 // pred_check
          %p806 = pneg %p214
        $region74: #{tpu_custom_call.1} parent=47 // pred_check_branch
          %808 = sbr.rel (%p806) target = $region76
        $region75: #{tpu_custom_call.1} parent=47 // pred_region
          %p809 = scmp.eq.s32.totalorder %s28, 2
          %s810 = scalar_select %p809, %s29, 0
          %s811 = smul.u32 4, %s810
          %s813 = ssub.s32 512, 512
          %814 = vsyncadd %s802, %s813
          %s815 = smul.addr %s811, 128
          %s816 = scalar_lea.hbm %s7, %s815
          %s818 = sshll.u32 %s805, 4
          %s819 = int_to_ptr.vmem [resolvable:$true] %s818
          %821 = dma.vmem_to_hbm [thread:$0]  %s819, 512, %s816, %s802
        $region76: #{tpu_custom_call.1} parent=47 // pred_fallthru
          _
      $region48: #{tpu_custom_call.1} parent=5 // pred_fallthru
        _
      %p822 = scmp.le.s32.totalorder 2, %s19
      // Predicated region
      $region77: #{tpu_custom_call.1} parent=5 // pred_check
        %p823 = pneg %p822
      $region78: #{tpu_custom_call.1} parent=5 // pred_check_branch
        %825 = sbr.rel (%p823) target = $region80
      $region79: #{tpu_custom_call.1} parent=5 // pred_region
        %s826 = ssub.s32 %s19, 2
        // Predicated region
        $region81: #{tpu_custom_call.1} parent=79 // pred_check
          %p827 = pneg %p220
        $region82: #{tpu_custom_call.1} parent=79 // pred_check_branch
          %829 = sbr.rel (%p827) target = $region84
        $region83: #{tpu_custom_call.1} parent=79 // pred_region
          %s830 = sand.u32 %s205, 1
          %s831 = scalar_lea.sflag [#allocation10], %s830
          %s832 = sand.u32 %s205, 1
          %s833 = smul.addr %s832, 32
          %s834 = scalar_lea.vmem [#allocation11], %s833
          %835 = dma.done %s831, 512
        $region84: #{tpu_custom_call.1} parent=79 // pred_fallthru
          _
      $region80: #{tpu_custom_call.1} parent=5 // pred_fallthru
        _
    $region6: #{tpu_custom_call.1} parent=1 // loop_footer
      %s23 = sadd.s32 1, %s19
    $region7: #{tpu_custom_call.1} parent=1 // loop_footer_branch
      %18 = sbr.rel target = $region3
    $region8: #{tpu_custom_call.1} parent=1 // loop_exit
      _
    %836 = vsyncpa [#allocation9], 1
    %s837 = scalar_lea.sflag [#allocation9], 1
    %838 = vsyncpa %s837, 1
    %839 = vsyncpa [#allocation10], 1
    %s840 = scalar_lea.sflag [#allocation10], 1
    %841 = vsyncpa %s840, 1

</llo_original>
